<compile_context>
chip_gen: v7x
topology: tpu7x:2x2x1
jax: 0.10.0
libtpu: 0.0.40
codegen_flags: <defaults>
</compile_context>

<pallas_src>
import jax
import jax.numpy as jnp
from jax.experimental import pallas as pl
from jax.experimental.pallas import tpu as pltpu


def gat_kernel(w_eff_ref,   # SMEM [Ein]            pre-folded Wv^T a_e
               h_all_ref,   # VMEM [N_src, Fin]     resident (constant block)
               d_ref,       # VMEM [Ein, T, N_src]  per dst tile (lane-dense slabs)
               adj_ref,     # VMEM [T, N_src]       per dst tile
               wwT_ref,     # VMEM [Fin, Fp]        resident
               wuT_ref,     # VMEM [Fin, Fp]        resident
               a_src_ref,   # VMEM [1, Fp]          resident
               wd_ref,      # VMEM [Fin, 1]         resident (Ww^T a_dst)
               out_ref):    # VMEM [T, Fp]
    T = out_ref.shape[0]
    i = pl.program_id(0)
    start = pl.multiple_of(i * T, T)         # T is a multiple of 8 -> aligned slice

    h_all = h_all_ref[...]                               # [N_src, Fin]
    h_dst = h_all_ref[pl.ds(start, T), :]                # [T, Fin] (no extra DMA)

    # fcW over all src nodes (needed for both the src logit and aggregation)
    # and fcU over the dst tile. K = Fin is tiny -> per-tile recompute of z_all
    # is cheap relative to the d stream and keeps the dst axis megacore-safe.
    z_all = jnp.dot(h_all, wwT_ref[...], preferred_element_type=jnp.float32)   # [N_src, Fp]
    zi_dst = jnp.dot(h_dst, wuT_ref[...], preferred_element_type=jnp.float32)  # [T, Fp]

    # Edge term of the attention logit: fcV(d) . a_e == sum_e (Wv^T a_e)[e] * d[e]
    # -> Ein-step VPU multiply-accumulate over lane-dense [T, N_src] slabs.
    s_e = w_eff_ref[0] * d_ref[0]
    for e in range(1, d_ref.shape[0]):
        s_e = s_e + w_eff_ref[e] * d_ref[e]

    # Attention logit a^T [z_src ; z_dst ; t]
    s_dst = jnp.dot(h_dst, wd_ref[...], preferred_element_type=jnp.float32)    # [T, 1]
    s_src = jax.lax.dot_general(a_src_ref[...], z_all, (((1,), (1,)), ((), ())),
                                preferred_element_type=jnp.float32)            # [1, N_src]
    score = s_dst + s_src + s_e                                                # [T, N_src]

    # leaky_relu (slope 0.01) then masked softmax over incoming edges (src axis).
    e_act = jnp.where(score >= 0, score, 0.01 * score)
    masked = jnp.where(adj_ref[...] > 0, e_act, -1e30)   # exp -> exactly 0 off-graph
    m = jnp.max(masked, axis=-1, keepdims=True)
    p = jnp.exp(masked - m)
    denom = jnp.sum(p, axis=-1, keepdims=True)

    # Deferred normalization: aggregate with unnormalized p, then scale the
    # small [T, Fp] result once by 1/denom.
    acc = jnp.dot(p, z_all, preferred_element_type=jnp.float32)                # [T, Fp]
    out_ref[...] = jnp.maximum(zi_dst + acc * pl.reciprocal(denom, approx=False), 0.0)


def gat_forward(h, d, adj, params, *, tile_dst=None, interpret=False):
    """Wrapper: parameter-only plumbing, lane-dense padding, dst-tile grid."""
    Wv, Ww, Wu, a = params
    N_dst, N_src = adj.shape
    N, Fin = h.shape
    Fout = Ww.shape[0]
    Eout, Ein = Wv.shape
    assert N == N_src == N_dst, "homogeneous graph expected"

    # Lane-dense padded output width (multiple of 128). Padding columns of the
    # weights are zero => padded output columns are exactly relu(0) = 0.
    Fp = ((Fout + 127) // 128) * 128

    # ---- parameter-only plumbing (tiny, done once, no activation data) ----
    a_src = a[:, :Fout]                                   # [1, Fout] src part
    a_dst = a[:, Fout:2 * Fout]                           # [1, Fout] dst part
    a_e = a[:, 2 * Fout:]                                 # [1, Eout] edge part
    w_eff = (a_e @ Wv).reshape(Ein).astype(jnp.float32)   # [Ein]   = Wv^T a_e
    wd = (Ww.T @ a_dst.T).astype(jnp.float32)             # [Fin,1] = Ww^T a_dst

    def pad_cols(x, width):
        return jnp.pad(x, ((0, 0), (0, width - x.shape[1])))

    wwT = pad_cols(Ww.T, Fp).astype(jnp.float32)           # [Fin, Fp]
    wuT = pad_cols(Wu.T, Fp).astype(jnp.float32)           # [Fin, Fp]
    a_src_p = pad_cols(a_src, Fp).astype(jnp.float32)      # [1, Fp]

    # d with Ein on the leading axis -> lane-dense [T, N_src] slabs in-kernel
    # (one-off XLA transpose at HBM bandwidth, outside the kernel).
    d_t = jnp.transpose(d, (2, 0, 1)).astype(jnp.float32)  # [Ein, N_dst, N_src]

    # ---- dst-tile selection: largest multiple of 8 dividing N_dst whose
    #      streamed, double-buffered blocks (d + adj) stay under ~8 MiB
    #      (safe for v7x's 64 MiB physical / 32 MiB scoped VMEM). ----
    if tile_dst is None:
        budget = 8 * 1024 * 1024
        tile_dst = 8
        for t in range(N_dst, 7, -8):
            if N_dst % t == 0 and (Ein + 1) * t * N_src * 4 * 2 <= budget:
                tile_dst = t
                break
    assert N_dst % tile_dst == 0 and tile_dst % 8 == 0
    T = tile_dst
    n_tiles = N_dst // T

    flops_per_tile = (
        2 * N_src * Fin * Fp          # z_all
        + 2 * T * Fin * Fp            # zi_dst
        + 2 * T * N_src * Ein         # edge-term MAC
        + 2 * T * Fin                 # s_dst
        + 2 * N_src * Fp              # s_src
        + 2 * T * N_src * Fp          # p @ z_all
        + 10 * T * N_src              # score-tile VPU elementwise
    )
    cost = pl.CostEstimate(
        flops=int(n_tiles * flops_per_tile),
        transcendentals=int(N_dst * N_src),
        bytes_accessed=int(4 * (d_t.size + adj.size + h.size + wwT.size
                                + wuT.size + a_src_p.size + wd.size
                                + N_dst * Fp)),
    )

    out_padded = pl.pallas_call(
        gat_kernel,
        out_shape=jax.ShapeDtypeStruct((N_dst, Fp), jnp.float32),
        grid=(n_tiles,),
        in_specs=[
            pl.BlockSpec(memory_space=pltpu.MemorySpace.SMEM),       # w_eff
            pl.BlockSpec((N_src, Fin), lambda i: (0, 0)),            # h (resident)
            pl.BlockSpec((Ein, T, N_src), lambda i: (0, i, 0)),      # d (dst tile)
            pl.BlockSpec((T, N_src), lambda i: (i, 0)),              # adj (dst tile)
            pl.BlockSpec((Fin, Fp), lambda i: (0, 0)),               # Ww^T (resident)
            pl.BlockSpec((Fin, Fp), lambda i: (0, 0)),               # Wu^T (resident)
            pl.BlockSpec((1, Fp), lambda i: (0, 0)),                 # a_src (resident)
            pl.BlockSpec((Fin, 1), lambda i: (0, 0)),                # Ww^T a_dst (resident)
        ],
        out_specs=pl.BlockSpec((T, Fp), lambda i: (i, 0)),
        compiler_params=pltpu.CompilerParams(
            dimension_semantics=("parallel",),        # megacore on v7x
            vmem_limit_bytes=32 * 1024 * 1024,        # fits v5e/v6e/v7x
        ),
        cost_estimate=cost,
        interpret=interpret,
    )(w_eff, h.astype(jnp.float32), d_t, adj.astype(jnp.float32),
      wwT, wuT, a_src_p, wd)

    return out_padded[:, :Fout]


def ref_forward(h, d, adj, params):
    """Pure-JAX reference of the same GAT forward (dense-adjacency form)."""
    Wv, Ww, Wu, a = params
    Fout = Ww.shape[0]
    z = h @ Ww.T
    z_i = h @ Wu.T
    t = jnp.einsum('dse,oe->dso', d, Wv)             # fcV(edge data)
    a_src = a[0, :Fout]
    a_dst = a[0, Fout:2 * Fout]
    a_e = a[0, 2 * Fout:]
    score = (z @ a_dst)[:, None] + (z @ a_src)[None, :] + t @ a_e
    e = jnp.where(score >= 0, score, 0.01 * score)   # leaky_relu
    masked = jnp.where(adj > 0, e, -jnp.inf)
    alpha = jax.nn.softmax(masked, axis=-1)
    alpha = jnp.where(adj > 0, alpha, 0.0)
    z_neighbor = alpha @ z
    return jax.nn.relu(z_i + z_neighbor)


if __name__ == "__main__":
    key = jax.random.PRNGKey(0)
    N, in_ndim, out_ndim = 16, 8, 16
    in_edim, out_edim = 4, 4

    ks = jax.random.split(key, 6)
    h = jax.random.normal(ks[0], (N, in_ndim), jnp.float32)
    d = jax.random.normal(ks[1], (N, N, in_edim), jnp.float32)
    adj = (jax.random.uniform(ks[2], (N, N)) < 0.4).astype(jnp.float32)
    adj = jnp.maximum(adj, jnp.eye(N, dtype=jnp.float32))  # self-loops

    # Deterministic synthetic parameters (shapes from GATLayer.__init__)
    Wv = 0.3 * jax.random.normal(ks[3], (out_edim, in_edim), jnp.float32)
    Ww = 0.3 * jax.random.normal(ks[4], (out_ndim, in_ndim), jnp.float32)
    Wu = 0.3 * jax.random.normal(ks[5], (out_ndim, in_ndim), jnp.float32)
    a = 0.3 * jax.random.normal(jax.random.PRNGKey(42),
                                (1, 2 * out_ndim + out_edim), jnp.float32)
    params = (Wv, Ww, Wu, a)

    # tile_dst=8 -> 2-step dst grid, exercising the pipelined/tiled path.
    out = gat_forward(h, d, adj, params, tile_dst=8)
    out = jax.block_until_ready(out)

    ref = ref_forward(h, d, adj, params)
    assert out.shape == (N, out_ndim)
    assert jnp.allclose(out, ref, rtol=1e-4, atol=1e-4), "mismatch vs reference"

    print("KERNEL_OK")
</pallas_src>

<mosaic_0001>
module attributes {stable_mosaic.version = 11 : i64} {
  func.func @gat_kernel(%arg0: i32, %arg1: memref<4xf32, #tpu.memory_space<smem>>, %arg2: memref<16x8xf32, #tpu.memory_space<vmem>>, %arg3: memref<4x8x16xf32, #tpu.memory_space<vmem>>, %arg4: memref<8x16xf32, #tpu.memory_space<vmem>>, %arg5: memref<8x128xf32, #tpu.memory_space<vmem>>, %arg6: memref<8x128xf32, #tpu.memory_space<vmem>>, %arg7: memref<1x128xf32, #tpu.memory_space<vmem>>, %arg8: memref<8x1xf32, #tpu.memory_space<vmem>>, %arg9: memref<8x128xf32, #tpu.memory_space<vmem>>) attributes {dimension_semantics = [#tpu.dimension_semantics<parallel>], iteration_bounds = array<i64: 2>, scalar_prefetch = 0 : i64, scratch_operands = 0 : i64, tpu.core_type = #tpu.core_type<tc>, window_params = [{transform_indices = @transform_0, window_bounds = array<i64: 4>}, {pipeline_mode = #tpu.pipeline_mode<synchronous>, transform_indices = @transform_1, window_bounds = array<i64: 16, 8>}, {transform_indices = @transform_2, window_bounds = array<i64: 4, 8, 16>}, {transform_indices = @transform_3, window_bounds = array<i64: 8, 16>}, {pipeline_mode = #tpu.pipeline_mode<synchronous>, transform_indices = @transform_4, window_bounds = array<i64: 8, 128>}, {pipeline_mode = #tpu.pipeline_mode<synchronous>, transform_indices = @transform_5, window_bounds = array<i64: 8, 128>}, {pipeline_mode = #tpu.pipeline_mode<synchronous>, transform_indices = @transform_6, window_bounds = array<i64: 1, 128>}, {pipeline_mode = #tpu.pipeline_mode<synchronous>, transform_indices = @transform_7, window_bounds = array<i64: 8, 1>}, {transform_indices = @transform_8, window_bounds = array<i64: 8, 128>}]} {
    %c8_i32 = arith.constant 8 : i32
    %0 = arith.muli %arg0, %c8_i32 : i32
    %1 = tpu.assume_multiple %0, 8 : i32
    %c0 = arith.constant 0 : index
    %c0_0 = arith.constant 0 : index
    %2 = vector.load %arg2[%c0, %c0_0] : memref<16x8xf32, #tpu.memory_space<vmem>>, vector<16x8xf32>
    %3 = arith.index_cast %1 : i32 to index
    %c0_1 = arith.constant 0 : index
    %4 = vector.load %arg2[%3, %c0_1] : memref<16x8xf32, #tpu.memory_space<vmem>>, vector<8x8xf32>
    %c0_2 = arith.constant 0 : index
    %c0_3 = arith.constant 0 : index
    %5 = vector.load %arg5[%c0_2, %c0_3] : memref<8x128xf32, #tpu.memory_space<vmem>>, vector<8x128xf32>
    %cst = arith.constant dense<0.000000e+00> : vector<16x128xf32>
    %6 = tpu.matmul %2, %5, %cst {dimension_numbers = #tpu.dot_dimension_numbers<[1], [0], [0], [1], [0, 0, 1, 1], [], []>} : vector<16x8xf32>, vector<8x128xf32>, vector<16x128xf32> -> vector<16x128xf32>
    %c0_4 = arith.constant 0 : index
    %c0_5 = arith.constant 0 : index
    %7 = vector.load %arg6[%c0_4, %c0_5] : memref<8x128xf32, #tpu.memory_space<vmem>>, vector<8x128xf32>
    %cst_6 = arith.constant dense<0.000000e+00> : vector<8x128xf32>
    %8 = tpu.matmul %4, %7, %cst_6 {dimension_numbers = #tpu.dot_dimension_numbers<[1], [0], [0], [1], [0, 0, 1, 1], [], []>} : vector<8x8xf32>, vector<8x128xf32>, vector<8x128xf32> -> vector<8x128xf32>
    %c0_7 = arith.constant 0 : index
    %9 = memref.load %arg1[%c0_7] : memref<4xf32, #tpu.memory_space<smem>>
    %c0_8 = arith.constant 0 : index
    %c0_9 = arith.constant 0 : index
    %c0_10 = arith.constant 0 : index
    %10 = vector.load %arg3[%c0_8, %c0_9, %c0_10] : memref<4x8x16xf32, #tpu.memory_space<vmem>>, vector<1x8x16xf32>
    %11 = vector.shape_cast %10 : vector<1x8x16xf32> to vector<8x16xf32>
    %12 = vector.broadcast %9 : f32 to vector<8x16xf32>
    %13 = arith.mulf %12, %11 : vector<8x16xf32>
    %c1 = arith.constant 1 : index
    %14 = memref.load %arg1[%c1] : memref<4xf32, #tpu.memory_space<smem>>
    %c1_11 = arith.constant 1 : index
    %c0_12 = arith.constant 0 : index
    %c0_13 = arith.constant 0 : index
    %15 = vector.load %arg3[%c1_11, %c0_12, %c0_13] : memref<4x8x16xf32, #tpu.memory_space<vmem>>, vector<1x8x16xf32>
    %16 = vector.shape_cast %15 : vector<1x8x16xf32> to vector<8x16xf32>
    %17 = vector.broadcast %14 : f32 to vector<8x16xf32>
    %18 = arith.mulf %17, %16 : vector<8x16xf32>
    %19 = arith.addf %13, %18 : vector<8x16xf32>
    %c2 = arith.constant 2 : index
    %20 = memref.load %arg1[%c2] : memref<4xf32, #tpu.memory_space<smem>>
    %c2_14 = arith.constant 2 : index
    %c0_15 = arith.constant 0 : index
    %c0_16 = arith.constant 0 : index
    %21 = vector.load %arg3[%c2_14, %c0_15, %c0_16] : memref<4x8x16xf32, #tpu.memory_space<vmem>>, vector<1x8x16xf32>
    %22 = vector.shape_cast %21 : vector<1x8x16xf32> to vector<8x16xf32>
    %23 = vector.broadcast %20 : f32 to vector<8x16xf32>
    %24 = arith.mulf %23, %22 : vector<8x16xf32>
    %25 = arith.addf %19, %24 : vector<8x16xf32>
    %c3 = arith.constant 3 : index
    %26 = memref.load %arg1[%c3] : memref<4xf32, #tpu.memory_space<smem>>
    %c3_17 = arith.constant 3 : index
    %c0_18 = arith.constant 0 : index
    %c0_19 = arith.constant 0 : index
    %27 = vector.load %arg3[%c3_17, %c0_18, %c0_19] : memref<4x8x16xf32, #tpu.memory_space<vmem>>, vector<1x8x16xf32>
    %28 = vector.shape_cast %27 : vector<1x8x16xf32> to vector<8x16xf32>
    %29 = vector.broadcast %26 : f32 to vector<8x16xf32>
    %30 = arith.mulf %29, %28 : vector<8x16xf32>
    %31 = arith.addf %25, %30 : vector<8x16xf32>
    %c0_20 = arith.constant 0 : index
    %c0_21 = arith.constant 0 : index
    %32 = vector.load %arg8[%c0_20, %c0_21] : memref<8x1xf32, #tpu.memory_space<vmem>>, vector<8x1xf32>
    %cst_22 = arith.constant dense<0.000000e+00> : vector<8x1xf32>
    %33 = tpu.matmul %4, %32, %cst_22 {dimension_numbers = #tpu.dot_dimension_numbers<[1], [0], [0], [1], [0, 0, 1, 1], [], []>} : vector<8x8xf32>, vector<8x1xf32>, vector<8x1xf32> -> vector<8x1xf32>
    %c0_23 = arith.constant 0 : index
    %c0_24 = arith.constant 0 : index
    %34 = vector.load %arg7[%c0_23, %c0_24] : memref<1x128xf32, #tpu.memory_space<vmem>>, vector<1x128xf32>
    %cst_25 = arith.constant dense<0.000000e+00> : vector<1x16xf32>
    %35 = tpu.matmul %34, %6, %cst_25 {dimension_numbers = #tpu.dot_dimension_numbers<[1], [1], [0], [0], [0, 0, 1, 0], [], []>} : vector<1x128xf32>, vector<16x128xf32>, vector<1x16xf32> -> vector<1x16xf32>
    %36 = vector.broadcast %33 : vector<8x1xf32> to vector<8x16xf32>
    %37 = vector.broadcast %35 : vector<1x16xf32> to vector<8x16xf32>
    %38 = arith.addf %36, %37 : vector<8x16xf32>
    %39 = arith.addf %38, %31 : vector<8x16xf32>
    %cst_26 = arith.constant 0.000000e+00 : f32
    %40 = vector.broadcast %cst_26 : f32 to vector<8x16xf32>
    %41 = arith.cmpf oge, %39, %40 : vector<8x16xf32>
    %cst_27 = arith.constant 0.00999999977 : f32
    %42 = vector.broadcast %cst_27 : f32 to vector<8x16xf32>
    %43 = arith.mulf %42, %39 : vector<8x16xf32>
    %44 = arith.select %41, %39, %43 : vector<8x16xi1>, vector<8x16xf32>
    %c0_28 = arith.constant 0 : index
    %c0_29 = arith.constant 0 : index
    %45 = vector.load %arg4[%c0_28, %c0_29] : memref<8x16xf32, #tpu.memory_space<vmem>>, vector<8x16xf32>
    %cst_30 = arith.constant 0.000000e+00 : f32
    %46 = vector.broadcast %cst_30 : f32 to vector<8x16xf32>
    %47 = arith.cmpf ogt, %45, %46 : vector<8x16xf32>
    %cst_31 = arith.constant -1.000000e+30 : f32
    %48 = vector.broadcast %cst_31 : f32 to vector<8x16xf32>
    %49 = arith.select %47, %44, %48 : vector<8x16xi1>, vector<8x16xf32>
    %cst_32 = arith.constant dense<0xFF800000> : vector<8xf32>
    %50 = vector.multi_reduction <maximumf>, %49, %cst_32 [1] : vector<8x16xf32> to vector<8xf32>
    %51 = vector.shape_cast %50 : vector<8xf32> to vector<8x1xf32>
    %52 = vector.broadcast %51 : vector<8x1xf32> to vector<8x16xf32>
    %53 = arith.subf %49, %52 : vector<8x16xf32>
    %54 = math.exp %53 : vector<8x16xf32>
    %cst_33 = arith.constant dense<0.000000e+00> : vector<8xf32>
    %55 = vector.multi_reduction <add>, %54, %cst_33 [1] : vector<8x16xf32> to vector<8xf32>
    %56 = vector.shape_cast %55 : vector<8xf32> to vector<8x1xf32>
    %cst_34 = arith.constant dense<0.000000e+00> : vector<8x128xf32>
    %57 = tpu.matmul %54, %6, %cst_34 {dimension_numbers = #tpu.dot_dimension_numbers<[1], [0], [0], [1], [0, 0, 1, 1], [], []>} : vector<8x16xf32>, vector<16x128xf32>, vector<8x128xf32> -> vector<8x128xf32>
    %58 = tpu.reciprocal %56 : vector<8x1xf32> -> vector<8x1xf32>
    %59 = vector.broadcast %58 : vector<8x1xf32> to vector<8x128xf32>
    %60 = arith.mulf %57, %59 : vector<8x128xf32>
    %61 = arith.addf %8, %60 : vector<8x128xf32>
    %cst_35 = arith.constant 0.000000e+00 : f32
    %62 = vector.broadcast %cst_35 : f32 to vector<8x128xf32>
    %63 = arith.maximumf %61, %62 : vector<8x128xf32>
    %c0_36 = arith.constant 0 : index
    %c0_37 = arith.constant 0 : index
    %64 = vector.load %arg9[%c0_36, %c0_37] : memref<8x128xf32, #tpu.memory_space<vmem>>, vector<8x128xf32>
    tpu.vector_store %arg9[%c0_36, %c0_37], %63 {strides = array<i32>} : memref<8x128xf32, #tpu.memory_space<vmem>>, vector<8x128xf32>,
    return
  }
  func.func @transform_0(%arg0: i32) -> i32 {
    %c0_i32 = arith.constant 0 : i32
    %c0_i32_0 = arith.constant 0 : i32
    return %c0_i32 : i32
  }
  func.func @transform_1(%arg0: i32) -> (i32, i32) {
    %c0_i32 = arith.constant 0 : i32
    %c0_i32_0 = arith.constant 0 : i32
    %c0_i32_1 = arith.constant 0 : i32
    return %c0_i32, %c0_i32_0 : i32, i32
  }
  func.func @transform_2(%arg0: i32) -> (i32, i32, i32) {
    %c0_i32 = arith.constant 0 : i32
    %c0_i32_0 = arith.constant 0 : i32
    %c0_i32_1 = arith.constant 0 : i32
    return %c0_i32, %arg0, %c0_i32_0 : i32, i32, i32
  }
  func.func @transform_3(%arg0: i32) -> (i32, i32) {
    %c0_i32 = arith.constant 0 : i32
    %c0_i32_0 = arith.constant 0 : i32
    return %arg0, %c0_i32 : i32, i32
  }
  func.func @transform_4(%arg0: i32) -> (i32, i32) {
    %c0_i32 = arith.constant 0 : i32
    %c0_i32_0 = arith.constant 0 : i32
    %c0_i32_1 = arith.constant 0 : i32
    return %c0_i32, %c0_i32_0 : i32, i32
  }
  func.func @transform_5(%arg0: i32) -> (i32, i32) {
    %c0_i32 = arith.constant 0 : i32
    %c0_i32_0 = arith.constant 0 : i32
    %c0_i32_1 = arith.constant 0 : i32
    return %c0_i32, %c0_i32_0 : i32, i32
  }
  func.func @transform_6(%arg0: i32) -> (i32, i32) {
    %c0_i32 = arith.constant 0 : i32
    %c0_i32_0 = arith.constant 0 : i32
    %c0_i32_1 = arith.constant 0 : i32
    return %c0_i32, %c0_i32_0 : i32, i32
  }
  func.func @transform_7(%arg0: i32) -> (i32, i32) {
    %c0_i32 = arith.constant 0 : i32
    %c0_i32_0 = arith.constant 0 : i32
    %c0_i32_1 = arith.constant 0 : i32
    return %c0_i32, %c0_i32_0 : i32, i32
  }
  func.func @transform_8(%arg0: i32) -> (i32, i32) {
    %c0_i32 = arith.constant 0 : i32
    %c0_i32_0 = arith.constant 0 : i32
    return %arg0, %c0_i32 : i32, i32
  }
}

</mosaic_0001>

<llo_original>
// kernel: tpu_custom_call.1
$region0: #{tpu_custom_call.1}
  #allocation0 [shape = 'u32[]', space=smem, size = 0x4, offset = 0x4, fixed_abs, tag = 'smem constant byte address 0x4 - core index']
  #allocation1 [shape = 'u32[144,128]{1,0:T(1,128)}', space=vmem, size = 0x12000, scoped, tag = 'internal scratch']
  %s0 = inlined_call_operand.hbm [shape: f32[4], index: 0, kind: input, shape index: {}]
  %s1 = inlined_call_operand.vmem [shape: f32[16,8], index: 1, kind: input, shape index: {}]
  %s2 = inlined_call_operand.hbm [shape: f32[4,16,16], index: 2, kind: input, shape index: {}]
  %s3 = inlined_call_operand.vmem [shape: f32[16,16], index: 3, kind: input, shape index: {}]
  %s4 = inlined_call_operand.vmem [shape: f32[8,128], index: 4, kind: input, shape index: {}]
  %s5 = inlined_call_operand.vmem [shape: f32[8,128], index: 5, kind: input, shape index: {}]
  %s6 = inlined_call_operand.vmem [shape: f32[1,128], index: 6, kind: input, shape index: {}]
  %s7 = inlined_call_operand.vmem [shape: f32[8,1], index: 7, kind: input, shape index: {}]
  %s8 = inlined_call_operand.hbm [shape: f32[16,128], index: 8, kind: output, shape index: {}]
  %s9 = sld [smem:[#allocation0]]
  $region73: #{tpu_custom_call.1} parent=0
    _
  %s11 = ssub.s32 1, %s9
  %s12 = scalar_select 0, %s11, %s9
  $region1: #{tpu_custom_call.1} parent=0
    #allocation2 [shape = 'u8[512]{0}', space=smem, size = 0x200, scoped, tag = 'input window, operand 0, single buffered']
    #allocation3 [shape = 's32[2]{0}', space=sflag, size = 0x8, scoped, tag = 'scoped memory for tpu_custom_call.1']
    #allocation4 [shape = 's32[2]{0}', space=sflag, size = 0x8, scoped, tag = 'scoped memory for tpu_custom_call.1']
    #allocation5 [shape = 's32[2]{0}', space=sflag, size = 0x8, scoped, tag = 'scoped memory for tpu_custom_call.1']
    #allocation6 [shape = 'u8[32768]{0}', space=vmem, size = 0x8000, scoped, tag = 'input window, operand 2']
    #allocation7 [shape = 'u8[8192]{0}', space=vmem, size = 0x2000, scoped, tag = 'output window, operand 0']
    %13 = vsyncpa [#allocation5], 0
    %14 = vsyncpa [#allocation3], 0
    %s15 = scalar_lea.sflag [#allocation3], 1
    %16 = vsyncpa %s15, 0
    %17 = vsyncpa [#allocation4], 0
    %s18 = scalar_lea.sflag [#allocation4], 1
    %19 = vsyncpa %s18, 0
    loop: start=0, step=1, limit=4
    $region2: #{tpu_custom_call.1} parent=1 // loop_pre_header
      _
    $region3: #{tpu_custom_call.1} parent=1 // loop_header
      %s21 = sphi 0, %s25
      %p22 = scmp.ge.s32.totalorder %s21, 4
      %s29 = sphi 0, %s29
      %s31 = sphi 0, %s29
      %s32 = sphi 0, %s31
      %s46 = sphi 0, %s32
      %s50 = sphi 0, %s50
      %s52 = sphi 0, %s50
      %s53 = sphi 0, %s52
      %s67 = sphi 0, %s53
      %s73 = sphi 0, %s75
      %s76 = sphi 0, %s73
      %s77 = sphi 0, %s76
      %s93 = sphi 0, %s77
      %s99 = sphi 0, %s101
      %s102 = sphi 0, %s99
      %s103 = sphi 0, %s102
      %s119 = sphi 0, %s103
      %s123 = sphi 0, %s123
      %s125 = sphi 0, %s123
      %s126 = sphi 0, %s125
      %s140 = sphi 0, %s126
      %s144 = sphi 0, %s144
      %s146 = sphi 0, %s144
      %s147 = sphi 0, %s146
      %s161 = sphi 0, %s147
      %s165 = sphi 0, %s165
      %s167 = sphi 0, %s165
      %s168 = sphi 0, %s167
      %s182 = sphi 0, %s168
      %s186 = sphi 0, %s186
      %s188 = sphi 0, %s186
      %s189 = sphi 0, %s188
      %s203 = sphi 0, %s189
      %s209 = sphi 0, %s211
      %s212 = sphi 0, %s209
      %s213 = sphi 0, %s212
      %s229 = sphi 0, %s213
    $region4: #{tpu_custom_call.1} parent=1 // loop_header_branch
      %24 = sbr.rel (%p22) target = $region8
    $region5: #{tpu_custom_call.1} parent=1 // loop_body
      %s26 = ssub.s32 %s21, 1
      %s27 = ssub.s32 %s21, 2
      %s28 = sadd.s32 %s21, 1
      %s30 = sadd.s32 %s29, 1
      %p33 = scmp.eq.s32.totalorder %s21, 1
      %p34 = scmp.ne.s32.totalorder %s29, %s31
      %p35 = scmp.eq.s32.totalorder %s21, 0
      %p36 = por %p34, %p35
      %p37 = scmp.ne.s32.totalorder %s29, %s31
      %p38 = scmp.eq.s32.totalorder %s26, 1
      %p39 = por %p37, %p38
      %p40 = scmp.ne.s32.totalorder %s31, %s32
      %p41 = scmp.eq.s32.totalorder %s26, 0
      %p42 = por %p40, %p41
      %p43 = scmp.ne.s32.totalorder %s31, %s32
      %p44 = scmp.eq.s32.totalorder %s27, 1
      %p45 = por %p43, %p44
      %p47 = scmp.ne.s32.totalorder %s32, %s46
      %p48 = scmp.eq.s32.totalorder %s27, 0
      %p49 = por %p47, %p48
      %s51 = sadd.s32 %s50, 1
      %p54 = scmp.eq.s32.totalorder %s21, 1
      %p55 = scmp.ne.s32.totalorder %s50, %s52
      %p56 = scmp.eq.s32.totalorder %s21, 0
      %p57 = por %p55, %p56
      %p58 = scmp.ne.s32.totalorder %s50, %s52
      %p59 = scmp.eq.s32.totalorder %s26, 1
      %p60 = por %p58, %p59
      %p61 = scmp.ne.s32.totalorder %s52, %s53
      %p62 = scmp.eq.s32.totalorder %s26, 0
      %p63 = por %p61, %p62
      %p64 = scmp.ne.s32.totalorder %s52, %s53
      %p65 = scmp.eq.s32.totalorder %s27, 1
      %p66 = por %p64, %p65
      %p68 = scmp.ne.s32.totalorder %s53, %s67
      %p69 = scmp.eq.s32.totalorder %s27, 0
      %p70 = por %p68, %p69
      %s71 = ssub.s32 %s21, %s28
      %p72 = scmp.eq.s32.totalorder %s71, 0
      %s74 = sadd.s32 %s73, 1
      %s75 = scalar_select %p72, %s73, %s74
      %p78 = pneg %p72
      %p79 = scmp.eq.s32.totalorder %s21, 1
      %p80 = por %p78, %p79
      %p81 = scmp.ne.s32.totalorder %s73, %s76
      %p82 = scmp.eq.s32.totalorder %s21, 0
      %p83 = por %p81, %p82
      %p84 = scmp.ne.s32.totalorder %s73, %s76
      %p85 = scmp.eq.s32.totalorder %s26, 1
      %p86 = por %p84, %p85
      %p87 = scmp.ne.s32.totalorder %s76, %s77
      %p88 = scmp.eq.s32.totalorder %s26, 0
      %p89 = por %p87, %p88
      %p90 = scmp.ne.s32.totalorder %s76, %s77
      %p91 = scmp.eq.s32.totalorder %s27, 1
      %p92 = por %p90, %p91
      %p94 = scmp.ne.s32.totalorder %s77, %s93
      %p95 = scmp.eq.s32.totalorder %s27, 0
      %p96 = por %p94, %p95
      %s97 = ssub.s32 %s21, %s28
      %p98 = scmp.eq.s32.totalorder %s97, 0
      %s100 = sadd.s32 %s99, 1
      %s101 = scalar_select %p98, %s99, %s100
      %p104 = pneg %p98
      %p105 = scmp.eq.s32.totalorder %s21, 1
      %p106 = por %p104, %p105
      %p107 = scmp.ne.s32.totalorder %s99, %s102
      %p108 = scmp.eq.s32.totalorder %s21, 0
      %p109 = por %p107, %p108
      %p110 = scmp.ne.s32.totalorder %s99, %s102
      %p111 = scmp.eq.s32.totalorder %s26, 1
      %p112 = por %p110, %p111
      %p113 = scmp.ne.s32.totalorder %s102, %s103
      %p114 = scmp.eq.s32.totalorder %s26, 0
      %p115 = por %p113, %p114
      %p116 = scmp.ne.s32.totalorder %s102, %s103
      %p117 = scmp.eq.s32.totalorder %s27, 1
      %p118 = por %p116, %p117
      %p120 = scmp.ne.s32.totalorder %s103, %s119
      %p121 = scmp.eq.s32.totalorder %s27, 0
      %p122 = por %p120, %p121
      %s124 = sadd.s32 %s123, 1
      %p127 = scmp.eq.s32.totalorder %s21, 1
      %p128 = scmp.ne.s32.totalorder %s123, %s125
      %p129 = scmp.eq.s32.totalorder %s21, 0
      %p130 = por %p128, %p129
      %p131 = scmp.ne.s32.totalorder %s123, %s125
      %p132 = scmp.eq.s32.totalorder %s26, 1
      %p133 = por %p131, %p132
      %p134 = scmp.ne.s32.totalorder %s125, %s126
      %p135 = scmp.eq.s32.totalorder %s26, 0
      %p136 = por %p134, %p135
      %p137 = scmp.ne.s32.totalorder %s125, %s126
      %p138 = scmp.eq.s32.totalorder %s27, 1
      %p139 = por %p137, %p138
      %p141 = scmp.ne.s32.totalorder %s126, %s140
      %p142 = scmp.eq.s32.totalorder %s27, 0
      %p143 = por %p141, %p142
      %s145 = sadd.s32 %s144, 1
      %p148 = scmp.eq.s32.totalorder %s21, 1
      %p149 = scmp.ne.s32.totalorder %s144, %s146
      %p150 = scmp.eq.s32.totalorder %s21, 0
      %p151 = por %p149, %p150
      %p152 = scmp.ne.s32.totalorder %s144, %s146
      %p153 = scmp.eq.s32.totalorder %s26, 1
      %p154 = por %p152, %p153
      %p155 = scmp.ne.s32.totalorder %s146, %s147
      %p156 = scmp.eq.s32.totalorder %s26, 0
      %p157 = por %p155, %p156
      %p158 = scmp.ne.s32.totalorder %s146, %s147
      %p159 = scmp.eq.s32.totalorder %s27, 1
      %p160 = por %p158, %p159
      %p162 = scmp.ne.s32.totalorder %s147, %s161
      %p163 = scmp.eq.s32.totalorder %s27, 0
      %p164 = por %p162, %p163
      %s166 = sadd.s32 %s165, 1
      %p169 = scmp.eq.s32.totalorder %s21, 1
      %p170 = scmp.ne.s32.totalorder %s165, %s167
      %p171 = scmp.eq.s32.totalorder %s21, 0
      %p172 = por %p170, %p171
      %p173 = scmp.ne.s32.totalorder %s165, %s167
      %p174 = scmp.eq.s32.totalorder %s26, 1
      %p175 = por %p173, %p174
      %p176 = scmp.ne.s32.totalorder %s167, %s168
      %p177 = scmp.eq.s32.totalorder %s26, 0
      %p178 = por %p176, %p177
      %p179 = scmp.ne.s32.totalorder %s167, %s168
      %p180 = scmp.eq.s32.totalorder %s27, 1
      %p181 = por %p179, %p180
      %p183 = scmp.ne.s32.totalorder %s168, %s182
      %p184 = scmp.eq.s32.totalorder %s27, 0
      %p185 = por %p183, %p184
      %s187 = sadd.s32 %s186, 1
      %p190 = scmp.eq.s32.totalorder %s21, 1
      %p191 = scmp.ne.s32.totalorder %s186, %s188
      %p192 = scmp.eq.s32.totalorder %s21, 0
      %p193 = por %p191, %p192
      %p194 = scmp.ne.s32.totalorder %s186, %s188
      %p195 = scmp.eq.s32.totalorder %s26, 1
      %p196 = por %p194, %p195
      %p197 = scmp.ne.s32.totalorder %s188, %s189
      %p198 = scmp.eq.s32.totalorder %s26, 0
      %p199 = por %p197, %p198
      %p200 = scmp.ne.s32.totalorder %s188, %s189
      %p201 = scmp.eq.s32.totalorder %s27, 1
      %p202 = por %p200, %p201
      %p204 = scmp.ne.s32.totalorder %s189, %s203
      %p205 = scmp.eq.s32.totalorder %s27, 0
      %p206 = por %p204, %p205
      %s207 = ssub.s32 %s21, %s28
      %p208 = scmp.eq.s32.totalorder %s207, 0
      %s210 = sadd.s32 %s209, 1
      %s211 = scalar_select %p208, %s209, %s210
      %p214 = pneg %p208
      %p215 = scmp.eq.s32.totalorder %s21, 1
      %p216 = por %p214, %p215
      %p217 = scmp.ne.s32.totalorder %s209, %s212
      %p218 = scmp.eq.s32.totalorder %s21, 0
      %p219 = por %p217, %p218
      %p220 = scmp.ne.s32.totalorder %s209, %s212
      %p221 = scmp.eq.s32.totalorder %s26, 1
      %p222 = por %p220, %p221
      %p223 = scmp.ne.s32.totalorder %s212, %s213
      %p224 = scmp.eq.s32.totalorder %s26, 0
      %p225 = por %p223, %p224
      %p226 = scmp.ne.s32.totalorder %s212, %s213
      %p227 = scmp.eq.s32.totalorder %s27, 1
      %p228 = por %p226, %p227
      %p230 = scmp.ne.s32.totalorder %s213, %s229
      %p231 = scmp.eq.s32.totalorder %s27, 0
      %p232 = por %p230, %p231
      %p233 = scmp.le.s32.totalorder 1, %s21
      %p234 = scmp.lt.s32.totalorder %s21, 3
      %p235 = pnand %p233, %p234
      %p236 = pneg %p235
      // Predicated region
      $region9: #{tpu_custom_call.1} parent=5 // pred_check
        _
      $region10: #{tpu_custom_call.1} parent=5 // pred_check_branch
        %238 = sbr.rel (%p235) target = $region12
      $region11: #{tpu_custom_call.1} parent=5 // pred_region
        %s239 = ssub.s32 %s21, 1
        // Predicated region
        $region13: #{tpu_custom_call.1} parent=11 // pred_check
          %p240 = pneg %p42
        $region14: #{tpu_custom_call.1} parent=11 // pred_check_branch
          %242 = sbr.rel (%p240) target = $region16
        $region15: #{tpu_custom_call.1} parent=11 // pred_region
          %s244 = ssub.s32 16, 16
          %245 = vsyncadd [#allocation5], %s244
          %248 = dma.hbm_to_smem %s0, 16, [#allocation2], [#allocation5]
        $region16: #{tpu_custom_call.1} parent=11 // pred_fallthru
          _
        // Predicated region
        $region17: #{tpu_custom_call.1} parent=11 // pred_check
          %p249 = pneg %p63
        $region18: #{tpu_custom_call.1} parent=11 // pred_check_branch
          %251 = sbr.rel (%p249) target = $region20
        $region19: #{tpu_custom_call.1} parent=11 // pred_region
          _
        $region20: #{tpu_custom_call.1} parent=11 // pred_fallthru
          _
        // Predicated region
        $region21: #{tpu_custom_call.1} parent=11 // pred_check
          %p252 = pneg %p136
        $region22: #{tpu_custom_call.1} parent=11 // pred_check_branch
          %254 = sbr.rel (%p252) target = $region24
        $region23: #{tpu_custom_call.1} parent=11 // pred_region
          _
        $region24: #{tpu_custom_call.1} parent=11 // pred_fallthru
          _
        // Predicated region
        $region25: #{tpu_custom_call.1} parent=11 // pred_check
          %p255 = pneg %p157
        $region26: #{tpu_custom_call.1} parent=11 // pred_check_branch
          %257 = sbr.rel (%p255) target = $region28
        $region27: #{tpu_custom_call.1} parent=11 // pred_region
          _
        $region28: #{tpu_custom_call.1} parent=11 // pred_fallthru
          _
        // Predicated region
        $region29: #{tpu_custom_call.1} parent=11 // pred_check
          %p258 = pneg %p178
        $region30: #{tpu_custom_call.1} parent=11 // pred_check_branch
          %260 = sbr.rel (%p258) target = $region32
        $region31: #{tpu_custom_call.1} parent=11 // pred_region
          _
        $region32: #{tpu_custom_call.1} parent=11 // pred_fallthru
          _
        // Predicated region
        $region33: #{tpu_custom_call.1} parent=11 // pred_check
          %p261 = pneg %p199
        $region34: #{tpu_custom_call.1} parent=11 // pred_check_branch
          %263 = sbr.rel (%p261) target = $region36
        $region35: #{tpu_custom_call.1} parent=11 // pred_region
          _
        $region36: #{tpu_custom_call.1} parent=11 // pred_fallthru
          _
      $region12: #{tpu_custom_call.1} parent=5 // pred_fallthru
        _
      %p264 = scmp.lt.s32.totalorder %s21, 2
      // Predicated region
      $region37: #{tpu_custom_call.1} parent=5 // pred_check
        %p265 = pneg %p264
      $region38: #{tpu_custom_call.1} parent=5 // pred_check_branch
        %267 = sbr.rel (%p265) target = $region40
      $region39: #{tpu_custom_call.1} parent=5 // pred_region
        // Predicated region
        $region41: #{tpu_custom_call.1} parent=39 // pred_check
          %p268 = pneg %p83
        $region42: #{tpu_custom_call.1} parent=39 // pred_check_branch
          %270 = sbr.rel (%p268) target = $region44
        $region43: #{tpu_custom_call.1} parent=39 // pred_region
          %s271 = sand.u32 %s73, 1
          %s272 = scalar_lea.sflag [#allocation3], %s271
          %s273 = sand.u32 %s73, 1
          %s274 = smul.addr %s273, 32
          %s275 = scalar_lea.vmem [#allocation6], %s274
          %s277 = ssub.s32 512, 512
          %278 = vsyncadd %s272, %s277
          %s279 = smul.addr %s21, 128
          %s280 = scalar_lea.hbm %s2, %s279
          %s281 = sshll.u32 %s275, 4
          %s282 = int_to_ptr.vmem [resolvable:$true] %s281
          %287 = dma.hbm_to_vmem [thread:$0]  %s280, 512, %s282, %s272, 256, 128, 8
        $region44: #{tpu_custom_call.1} parent=39 // pred_fallthru
          _
        // Predicated region
        $region45: #{tpu_custom_call.1} parent=39 // pred_check
          %p288 = pneg %p109
        $region46: #{tpu_custom_call.1} parent=39 // pred_check_branch
          %290 = sbr.rel (%p288) target = $region48
        $region47: #{tpu_custom_call.1} parent=39 // pred_region
          %p291 = scmp.lt.s32.totalorder %s21, 1
          %s292 = scalar_select %p291, %s21, 1
          %s293 = smul.addr %s292, 8
          %s294 = scalar_lea.vmem %s3, %s293
        $region48: #{tpu_custom_call.1} parent=39 // pred_fallthru
          _
      $region40: #{tpu_custom_call.1} parent=5 // pred_fallthru
        _
      %p295 = scmp.le.s32.totalorder 1, %s21
      %p296 = scmp.lt.s32.totalorder %s21, 3
      %p297 = pnand %p295, %p296
      %p298 = pneg %p297
      // Predicated region
      $region49: #{tpu_custom_call.1} parent=5 // pred_check
        _
      $region50: #{tpu_custom_call.1} parent=5 // pred_check_branch
        %300 = sbr.rel (%p297) target = $region52
      $region51: #{tpu_custom_call.1} parent=5 // pred_region
        %s301 = ssub.s32 %s21, 1
        // Predicated region
        $region53: #{tpu_custom_call.1} parent=51 // pred_check
          %p302 = pneg %p42
        $region54: #{tpu_custom_call.1} parent=51 // pred_check_branch
          %304 = sbr.rel (%p302) target = $region56
        $region55: #{tpu_custom_call.1} parent=51 // pred_region
          %305 = dma.done [#allocation5], 16
        $region56: #{tpu_custom_call.1} parent=51 // pred_fallthru
          _
        %s306 = sand.u32 %s76, 1
        %s307 = scalar_lea.sflag [#allocation3], %s306
        %s308 = sand.u32 %s76, 1
        %s309 = smul.addr %s308, 32
        %s310 = scalar_lea.vmem [#allocation6], %s309
        // Predicated region
        $region57: #{tpu_custom_call.1} parent=51 // pred_check
          %p311 = pneg %p89
        $region58: #{tpu_custom_call.1} parent=51 // pred_check_branch
          %313 = sbr.rel (%p311) target = $region60
        $region59: #{tpu_custom_call.1} parent=51 // pred_region
          %314 = dma.done %s307, 512
        $region60: #{tpu_custom_call.1} parent=51 // pred_fallthru
          _
        %315 = sfence
        %p316 = pneg %p42
        %p317 = pneg %p39
        %p318 = pneg %p63
        %p319 = pneg %p60
        %s320 = sand.u32 %s76, 1
        %s321 = scalar_lea.sflag [#allocation3], %s320
        %s322 = sand.u32 %s76, 1
        %s323 = smul.addr %s322, 32
        %s324 = scalar_lea.vmem [#allocation6], %s323
        %p325 = pneg %p89
        %p326 = pneg %p86
        %p327 = scmp.lt.s32.totalorder %s26, 1
        %s328 = scalar_select %p327, %s26, 1
        %s329 = smul.addr %s328, 8
        %s330 = scalar_lea.vmem %s3, %s329
        %p331 = pneg %p115
        %p332 = pneg %p112
        %p333 = pneg %p136
        %p334 = pneg %p133
        %p335 = pneg %p157
        %p336 = pneg %p154
        %p337 = pneg %p178
        %p338 = pneg %p175
        %p339 = pneg %p199
        %p340 = pneg %p196
        %p341 = pneg %p225
        %p342 = pneg %p222
        %s343 = sand.u32 %s212, 1
        %s344 = scalar_lea.sflag [#allocation4], %s343
        %s345 = sand.u32 %s212, 1
        %s346 = smul.addr %s345, 8
        %s347 = scalar_lea.vmem [#allocation7], %s346
        %p348 = scmp.lt.s32.totalorder %s26, 1
        %s349 = scalar_select %p348, %s26, 1
        %s350 = smul.addr %s349, 8
        %s351 = scalar_lea.vmem %s3, %s350
        %s352 = smul.u32 %s26, 8
        %v353 = vld [vmem:[%s1] sm:$0xff]
        %v354 = vld [vmem:[%s1 + $0x8] sm:$0xff]
        %s355 = scalar_lea.vmem %s1, %s352
        %v356 = vld [vmem:[%s355] sm:$0xff]
        %v357 = vld [vmem:[%s4] sm:$0xff]
        %vm358 = vcmask 64512
        %v360 = vsel %vm358, %v353, 0
        %v363 = vsel %vm358, %v354, 0
        %365 = vmatprep.subr.mxu0 0.0
        %366 = vmatpush1.msra.mxu0 %v357
        %367 = vmatprep.subr.mxu0 0.0
        %368 = vmatpush1.msra.mxu0 0.0
        %369 = vmatprep.subr.mxu0 0.0
        %370 = vmatpush1.msra.mxu0 0.0
        %371 = vmatprep.subr.mxu0 0.0
        %372 = vmatpush1.msra.mxu0 0.0
        %373 = vmatprep.subr.mxu0 0.0
        %374 = vmatpush1.msra.mxu0 0.0
        %375 = vmatprep.subr.mxu0 0.0
        %376 = vmatpush1.msra.mxu0 0.0
        %377 = vmatprep.subr.mxu0 0.0
        %378 = vmatpush1.msra.mxu0 0.0
        %379 = vmatprep.subr.mxu0 0.0
        %380 = vmatpush1.msra.mxu0 0.0
        %381 = vmatprep.subr.mxu0 0.0
        %382 = vmatpush1.msra.mxu0 0.0
        %383 = vmatprep.subr.mxu0 0.0
        %384 = vmatpush1.msra.mxu0 0.0
        %385 = vmatprep.subr.mxu0 0.0
        %386 = vmatpush1.msra.mxu0 0.0
        %387 = vmatprep.subr.mxu0 0.0
        %388 = vmatpush1.msra.mxu0 0.0
        %389 = vmatprep.subr.mxu0 0.0
        %390 = vmatpush1.msra.mxu0 0.0
        %391 = vmatprep.subr.mxu0 0.0
        %392 = vmatpush1.msra.mxu0 0.0
        %393 = vmatprep.subr.mxu0 0.0
        %394 = vmatpush1.msra.mxu0 0.0
        %395 = vmatprep.subr.mxu0 0.0
        %396 = vmatpush1.msra.mxu0 0.0
        %397 = vmatprep.subr.mxu0 0.0
        %398 = vmatpush1.msra.mxu0 0.0
        %399 = vmatprep.subr.mxu0 0.0
        %400 = vmatpush1.msra.mxu0 0.0
        %401 = vmatprep.subr.mxu0 0.0
        %402 = vmatpush1.msra.mxu0 0.0
        %403 = vmatprep.subr.mxu0 0.0
        %404 = vmatpush1.msra.mxu0 0.0
        %405 = vmatprep.subr.mxu0 0.0
        %406 = vmatpush1.msra.mxu0 0.0
        %407 = vmatprep.subr.mxu0 0.0
        %408 = vmatpush1.msra.mxu0 0.0
        %409 = vmatprep.subr.mxu0 0.0
        %410 = vmatpush1.msra.mxu0 0.0
        %411 = vmatprep.subr.mxu0 0.0
        %412 = vmatpush1.msra.mxu0 0.0
        %413 = vmatprep.subr.mxu0 0.0
        %414 = vmatpush1.msra.mxu0 0.0
        %415 = vmatprep.subr.mxu0 0.0
        %416 = vmatpush1.msra.mxu0 0.0
        %417 = vmatprep.subr.mxu0 0.0
        %418 = vmatpush1.msra.mxu0 0.0
        %419 = vmatprep.subr.mxu0 0.0
        %420 = vmatpush1.msra.mxu0 0.0
        %421 = vmatprep.subr.mxu0 0.0
        %422 = vmatpush1.msra.mxu0 0.0
        %423 = vmatprep.subr.mxu0 0.0
        %424 = vmatpush1.msra.mxu0 0.0
        %425 = vmatprep.subr.mxu0 0.0
        %426 = vmatpush1.msra.mxu0 0.0
        %427 = vmatprep.subr.mxu0 0.0
        %428 = vmatpush1.msra.mxu0 0.0
        %429 = vmatprep.mubr.f32.mxu0 0.0
        %430 = vmatmul.mubr.f32.gmra.mrb[0].mxu0 %v360
        %v431 = vpop.f32.mrb[0].mxu0
        %v432 = vadd.f32 0.0, %v431
        %v433 = vpop.f32.mrb[0].mxu0
        %434 = vmatprep.mubr.f32.mxu0 0.0
        %435 = vmatmul.mubr.f32.gmra.mrb[0].mxu0 %v363
        %v436 = vpop.f32.mrb[0].mxu0
        %v437 = vadd.f32 0.0, %v436
        %v438 = vpop.f32.mrb[0].mxu0
        %439 = vdwg.mxu0
        %v440 = vld [vmem:[%s5] sm:$0xff]
        %s441 = sld [smem:[#allocation2]]
        %v442 = vld [vmem:[%s310] sm:$0xff]
        %v443 = vstv %s441
        %v444 = vmul.f32 %v443, %v442
        %s445 = sld [smem:[#allocation2 + $0x1]]
        %s446 = scalar_lea.vmem %s310, 8 [#allocation6]
        %v447 = vld [vmem:[%s446] sm:$0xff]
        %v448 = vstv %s445
        %v449 = vmul.f32 %v448, %v447
        %v450 = vadd.f32 %v444, %v449
        %s451 = sld [smem:[#allocation2 + $0x2]]
        %s452 = scalar_lea.vmem %s310, 16 [#allocation6]
        %v453 = vld [vmem:[%s452] sm:$0xff]
        %v454 = vstv %s451
        %v455 = vmul.f32 %v454, %v453
        %v456 = vadd.f32 %v450, %v455
        %s457 = sld [smem:[#allocation2 + $0x3]]
        %s458 = scalar_lea.vmem %s310, 24 [#allocation6]
        %v459 = vld [vmem:[%s458] sm:$0xff]
        %v460 = vstv %s457
        %v461 = vmul.f32 %v460, %v459
        %v462 = vadd.f32 %v456, %v461
        %v463 = vld [vmem:[%s7] sm:$0xff]
        %v465 = vsel %vm358, %v356, 0
        %467 = vmatprep.subr.mxu0 0.0
        %468 = vmatpush1.msra.mxu0 %v463
        %469 = vmatprep.subr.mxu0 0.0
        %470 = vmatpush1.msra.mxu0 0.0
        %471 = vmatprep.subr.mxu0 0.0
        %472 = vmatpush1.msra.mxu0 0.0
        %473 = vmatprep.subr.mxu0 0.0
        %474 = vmatpush1.msra.mxu0 0.0
        %475 = vmatprep.subr.mxu0 0.0
        %476 = vmatpush1.msra.mxu0 0.0
        %477 = vmatprep.subr.mxu0 0.0
        %478 = vmatpush1.msra.mxu0 0.0
        %479 = vmatprep.subr.mxu0 0.0
        %480 = vmatpush1.msra.mxu0 0.0
        %481 = vmatprep.subr.mxu0 0.0
        %482 = vmatpush1.msra.mxu0 0.0
        %483 = vmatprep.subr.mxu0 0.0
        %484 = vmatpush1.msra.mxu0 0.0
        %485 = vmatprep.subr.mxu0 0.0
        %486 = vmatpush1.msra.mxu0 0.0
        %487 = vmatprep.subr.mxu0 0.0
        %488 = vmatpush1.msra.mxu0 0.0
        %489 = vmatprep.subr.mxu0 0.0
        %490 = vmatpush1.msra.mxu0 0.0
        %491 = vmatprep.subr.mxu0 0.0
        %492 = vmatpush1.msra.mxu0 0.0
        %493 = vmatprep.subr.mxu0 0.0
        %494 = vmatpush1.msra.mxu0 0.0
        %495 = vmatprep.subr.mxu0 0.0
        %496 = vmatpush1.msra.mxu0 0.0
        %497 = vmatprep.subr.mxu0 0.0
        %498 = vmatpush1.msra.mxu0 0.0
        %499 = vmatprep.subr.mxu0 0.0
        %500 = vmatpush1.msra.mxu0 0.0
        %501 = vmatprep.subr.mxu0 0.0
        %502 = vmatpush1.msra.mxu0 0.0
        %503 = vmatprep.subr.mxu0 0.0
        %504 = vmatpush1.msra.mxu0 0.0
        %505 = vmatprep.subr.mxu0 0.0
        %506 = vmatpush1.msra.mxu0 0.0
        %507 = vmatprep.subr.mxu0 0.0
        %508 = vmatpush1.msra.mxu0 0.0
        %509 = vmatprep.subr.mxu0 0.0
        %510 = vmatpush1.msra.mxu0 0.0
        %511 = vmatprep.subr.mxu0 0.0
        %512 = vmatpush1.msra.mxu0 0.0
        %513 = vmatprep.subr.mxu0 0.0
        %514 = vmatpush1.msra.mxu0 0.0
        %515 = vmatprep.subr.mxu0 0.0
        %516 = vmatpush1.msra.mxu0 0.0
        %517 = vmatprep.subr.mxu0 0.0
        %518 = vmatpush1.msra.mxu0 0.0
        %519 = vmatprep.subr.mxu0 0.0
        %520 = vmatpush1.msra.mxu0 0.0
        %521 = vmatprep.subr.mxu0 0.0
        %522 = vmatpush1.msra.mxu0 0.0
        %523 = vmatprep.subr.mxu0 0.0
        %524 = vmatpush1.msra.mxu0 0.0
        %525 = vmatprep.subr.mxu0 0.0
        %526 = vmatpush1.msra.mxu0 0.0
        %527 = vmatprep.subr.mxu0 0.0
        %528 = vmatpush1.msra.mxu0 0.0
        %529 = vmatprep.subr.mxu0 0.0
        %530 = vmatpush1.msra.mxu0 0.0
        %531 = vmatprep.mubr.f32.mxu0 0.0
        %532 = vmatmul.mubr.f32.gmra.mrb[0].mxu0 %v465
        %v533 = vpop.f32.mrb[0].mxu0
        %v534 = vadd.f32 0.0, %v533
        %v535 = vpop.f32.mrb[0].mxu0
        %536 = vdwg.mxu0
        %v537 = vld [vmem:[%s6] sm:$0x1]
        %538 = vmatprep.subr.mxu0 0.0
        %539 = vmatpush1.xpose.msra.mxu0 %v432
        %540 = vmatprep.subr.mxu0 0.0
        %541 = vmatpush1.xpose.msra.mxu0 %v437
        %542 = vmatprep.subr.mxu0 0.0
        %543 = vmatpush1.xpose.msra.mxu0 0.0
        %544 = vmatprep.subr.mxu0 0.0
        %545 = vmatpush1.xpose.msra.mxu0 0.0
        %546 = vmatprep.subr.mxu0 0.0
        %547 = vmatpush1.xpose.msra.mxu0 0.0
        %548 = vmatprep.subr.mxu0 0.0
        %549 = vmatpush1.xpose.msra.mxu0 0.0
        %550 = vmatprep.subr.mxu0 0.0
        %551 = vmatpush1.xpose.msra.mxu0 0.0
        %552 = vmatprep.subr.mxu0 0.0
        %553 = vmatpush1.xpose.msra.mxu0 0.0
        %554 = vmatprep.subr.mxu0 0.0
        %555 = vmatpush1.xpose.msra.mxu0 0.0
        %556 = vmatprep.subr.mxu0 0.0
        %557 = vmatpush1.xpose.msra.mxu0 0.0
        %558 = vmatprep.subr.mxu0 0.0
        %559 = vmatpush1.xpose.msra.mxu0 0.0
        %560 = vmatprep.subr.mxu0 0.0
        %561 = vmatpush1.xpose.msra.mxu0 0.0
        %562 = vmatprep.subr.mxu0 0.0
        %563 = vmatpush1.xpose.msra.mxu0 0.0
        %564 = vmatprep.subr.mxu0 0.0
        %565 = vmatpush1.xpose.msra.mxu0 0.0
        %566 = vmatprep.subr.mxu0 0.0
        %567 = vmatpush1.xpose.msra.mxu0 0.0
        %568 = vmatprep.subr.mxu0 0.0
        %569 = vmatpush1.xpose.msra.mxu0 0.0
        %570 = vmatprep.subr.mxu0 0.0
        %571 = vmatpush1.xpose.msra.mxu0 0.0
        %572 = vmatprep.subr.mxu0 0.0
        %573 = vmatpush1.xpose.msra.mxu0 0.0
        %574 = vmatprep.subr.mxu0 0.0
        %575 = vmatpush1.xpose.msra.mxu0 0.0
        %576 = vmatprep.subr.mxu0 0.0
        %577 = vmatpush1.xpose.msra.mxu0 0.0
        %578 = vmatprep.subr.mxu0 0.0
        %579 = vmatpush1.xpose.msra.mxu0 0.0
        %580 = vmatprep.subr.mxu0 0.0
        %581 = vmatpush1.xpose.msra.mxu0 0.0
        %582 = vmatprep.subr.mxu0 0.0
        %583 = vmatpush1.xpose.msra.mxu0 0.0
        %584 = vmatprep.subr.mxu0 0.0
        %585 = vmatpush1.xpose.msra.mxu0 0.0
        %586 = vmatprep.subr.mxu0 0.0
        %587 = vmatpush1.xpose.msra.mxu0 0.0
        %588 = vmatprep.subr.mxu0 0.0
        %589 = vmatpush1.xpose.msra.mxu0 0.0
        %590 = vmatprep.subr.mxu0 0.0
        %591 = vmatpush1.xpose.msra.mxu0 0.0
        %592 = vmatprep.subr.mxu0 0.0
        %593 = vmatpush1.xpose.msra.mxu0 0.0
        %594 = vmatprep.subr.mxu0 0.0
        %595 = vmatpush1.xpose.msra.mxu0 0.0
        %596 = vmatprep.subr.mxu0 0.0
        %597 = vmatpush1.xpose.msra.mxu0 0.0
        %598 = vmatprep.subr.mxu0 0.0
        %599 = vmatpush1.xpose.msra.mxu0 0.0
        %600 = vmatprep.subr.mxu0 0.0
        %601 = vmatpush1.xpose.msra.mxu0 0.0
        %602 = vmatprep.mubr.f32.mxu0 0.0
        %603 = vmatmul.mubr.f32.gmra.mrb[0].mxu0 %v537
        %v604 = vpop.f32.mrb[0].mxu0
        %v605 = vadd.f32 0.0, %v604
        %v606 = vpop.f32.mrb[0].mxu0
        %607 = vdwg.mxu0
        %609 = vset.pattern.permute.xlu0 0
        %610 = vperm.xlu0 %609, %v534
        %v611 = vpop.permute.xlu0 %610
        %v613 = vlaneseq
        %v614 = vshrl.u32 %v613, 7
        %v615 = vsub.s32 0, %v614
        %v616 = vrot.slane %v605, %v615
        %v617 = vadd.f32 %v611, %v616
        %v618 = vadd.f32 %v617, %v462
        %vm619 = vcmp.ge.f32.partialorder %v618, 0.0
        %v620 = vmul.f32 %v618, 0.01
        %v621 = vsel %vm619, %v618, %v620
        %v622 = vld [vmem:[%s351] sm:$0xff]
        %vm623 = vcmp.gt.f32.partialorder %v622, 0.0
        %v624 = vsel %vm623, %v621, -1e+30
        %vm625 = vcmask 130048
        %v626 = vsel %vm625, %v624, -inf
        %627 = vmax.xlane.f32.xlu0 %v626
        %v628 = vpop.xlane.xlu0 %627
        %v629 = vsub.f32 %v624, %v628
        %v630 = vmul.f32 %v629, 1.442695
        %v631 = vpow.pop %v630
        %v632 = vsel %vm625, %v631, 0.0
        %633 = vadd.xlane.f32.xlu0 %v632
        %v634 = vpop.xlane.xlu0 %633
        %v636 = vsel %vm625, %v631, 0
        %638 = vmatprep.subr.mxu0 0.0
        %639 = vmatpush1.msra.mxu0 %v432
        %640 = vmatprep.subr.mxu0 0.0
        %641 = vmatpush1.msra.mxu0 %v437
        %642 = vmatprep.subr.mxu0 0.0
        %643 = vmatpush1.msra.mxu0 0.0
        %644 = vmatprep.subr.mxu0 0.0
        %645 = vmatpush1.msra.mxu0 0.0
        %646 = vmatprep.subr.mxu0 0.0
        %647 = vmatpush1.msra.mxu0 0.0
        %648 = vmatprep.subr.mxu0 0.0
        %649 = vmatpush1.msra.mxu0 0.0
        %650 = vmatprep.subr.mxu0 0.0
        %651 = vmatpush1.msra.mxu0 0.0
        %652 = vmatprep.subr.mxu0 0.0
        %653 = vmatpush1.msra.mxu0 0.0
        %654 = vmatprep.subr.mxu0 0.0
        %655 = vmatpush1.msra.mxu0 0.0
        %656 = vmatprep.subr.mxu0 0.0
        %657 = vmatpush1.msra.mxu0 0.0
        %658 = vmatprep.subr.mxu0 0.0
        %659 = vmatpush1.msra.mxu0 0.0
        %660 = vmatprep.subr.mxu0 0.0
        %661 = vmatpush1.msra.mxu0 0.0
        %662 = vmatprep.subr.mxu0 0.0
        %663 = vmatpush1.msra.mxu0 0.0
        %664 = vmatprep.subr.mxu0 0.0
        %665 = vmatpush1.msra.mxu0 0.0
        %666 = vmatprep.subr.mxu0 0.0
        %667 = vmatpush1.msra.mxu0 0.0
        %668 = vmatprep.subr.mxu0 0.0
        %669 = vmatpush1.msra.mxu0 0.0
        %670 = vmatprep.subr.mxu0 0.0
        %671 = vmatpush1.msra.mxu0 0.0
        %672 = vmatprep.subr.mxu0 0.0
        %673 = vmatpush1.msra.mxu0 0.0
        %674 = vmatprep.subr.mxu0 0.0
        %675 = vmatpush1.msra.mxu0 0.0
        %676 = vmatprep.subr.mxu0 0.0
        %677 = vmatpush1.msra.mxu0 0.0
        %678 = vmatprep.subr.mxu0 0.0
        %679 = vmatpush1.msra.mxu0 0.0
        %680 = vmatprep.subr.mxu0 0.0
        %681 = vmatpush1.msra.mxu0 0.0
        %682 = vmatprep.subr.mxu0 0.0
        %683 = vmatpush1.msra.mxu0 0.0
        %684 = vmatprep.subr.mxu0 0.0
        %685 = vmatpush1.msra.mxu0 0.0
        %686 = vmatprep.subr.mxu0 0.0
        %687 = vmatpush1.msra.mxu0 0.0
        %688 = vmatprep.subr.mxu0 0.0
        %689 = vmatpush1.msra.mxu0 0.0
        %690 = vmatprep.subr.mxu0 0.0
        %691 = vmatpush1.msra.mxu0 0.0
        %692 = vmatprep.subr.mxu0 0.0
        %693 = vmatpush1.msra.mxu0 0.0
        %694 = vmatprep.subr.mxu0 0.0
        %695 = vmatpush1.msra.mxu0 0.0
        %696 = vmatprep.subr.mxu0 0.0
        %697 = vmatpush1.msra.mxu0 0.0
        %698 = vmatprep.subr.mxu0 0.0
        %699 = vmatpush1.msra.mxu0 0.0
        %700 = vmatprep.subr.mxu0 0.0
        %701 = vmatpush1.msra.mxu0 0.0
        %702 = vmatprep.mubr.f32.mxu0 0.0
        %703 = vmatmul.mubr.f32.gmra.mrb[0].mxu0 %v636
        %v704 = vpop.f32.mrb[0].mxu0
        %v705 = vadd.f32 0.0, %v704
        %v706 = vpop.f32.mrb[0].mxu0
        %707 = vdwg.mxu0
        %v708 = vrcp.pop %v634
        %v709 = vmul.f32 %v705, %v708
        %710 = vmatprep.subr.mxu0 0.0
        %711 = vmatpush1.msra.mxu0 %v440
        %712 = vmatprep.subr.mxu0 0.0
        %713 = vmatpush1.msra.mxu0 0.0
        %714 = vmatprep.subr.mxu0 0.0
        %715 = vmatpush1.msra.mxu0 0.0
        %716 = vmatprep.subr.mxu0 0.0
        %717 = vmatpush1.msra.mxu0 0.0
        %718 = vmatprep.subr.mxu0 0.0
        %719 = vmatpush1.msra.mxu0 0.0
        %720 = vmatprep.subr.mxu0 0.0
        %721 = vmatpush1.msra.mxu0 0.0
        %722 = vmatprep.subr.mxu0 0.0
        %723 = vmatpush1.msra.mxu0 0.0
        %724 = vmatprep.subr.mxu0 0.0
        %725 = vmatpush1.msra.mxu0 0.0
        %726 = vmatprep.subr.mxu0 0.0
        %727 = vmatpush1.msra.mxu0 0.0
        %728 = vmatprep.subr.mxu0 0.0
        %729 = vmatpush1.msra.mxu0 0.0
        %730 = vmatprep.subr.mxu0 0.0
        %731 = vmatpush1.msra.mxu0 0.0
        %732 = vmatprep.subr.mxu0 0.0
        %733 = vmatpush1.msra.mxu0 0.0
        %734 = vmatprep.subr.mxu0 0.0
        %735 = vmatpush1.msra.mxu0 0.0
        %736 = vmatprep.subr.mxu0 0.0
        %737 = vmatpush1.msra.mxu0 0.0
        %738 = vmatprep.subr.mxu0 0.0
        %739 = vmatpush1.msra.mxu0 0.0
        %740 = vmatprep.subr.mxu0 0.0
        %741 = vmatpush1.msra.mxu0 0.0
        %742 = vmatprep.subr.mxu0 0.0
        %743 = vmatpush1.msra.mxu0 0.0
        %744 = vmatprep.subr.mxu0 0.0
        %745 = vmatpush1.msra.mxu0 0.0
        %746 = vmatprep.subr.mxu0 0.0
        %747 = vmatpush1.msra.mxu0 0.0
        %748 = vmatprep.subr.mxu0 0.0
        %749 = vmatpush1.msra.mxu0 0.0
        %750 = vmatprep.subr.mxu0 0.0
        %751 = vmatpush1.msra.mxu0 0.0
        %752 = vmatprep.subr.mxu0 0.0
        %753 = vmatpush1.msra.mxu0 0.0
        %754 = vmatprep.subr.mxu0 0.0
        %755 = vmatpush1.msra.mxu0 0.0
        %756 = vmatprep.subr.mxu0 0.0
        %757 = vmatpush1.msra.mxu0 0.0
        %758 = vmatprep.subr.mxu0 0.0
        %759 = vmatpush1.msra.mxu0 0.0
        %760 = vmatprep.subr.mxu0 0.0
        %761 = vmatpush1.msra.mxu0 0.0
        %762 = vmatprep.subr.mxu0 0.0
        %763 = vmatpush1.msra.mxu0 0.0
        %764 = vmatprep.subr.mxu0 0.0
        %765 = vmatpush1.msra.mxu0 0.0
        %766 = vmatprep.subr.mxu0 0.0
        %767 = vmatpush1.msra.mxu0 0.0
        %768 = vmatprep.subr.mxu0 0.0
        %769 = vmatpush1.msra.mxu0 0.0
        %770 = vmatprep.subr.mxu0 0.0
        %771 = vmatpush1.msra.mxu0 0.0
        %772 = vmatprep.subr.mxu0 0.0
        %773 = vmatpush1.msra.mxu0 0.0
        %774 = vmatprep.mubr.f32.mxu0 0.0
        %775 = vmatmul.mubr.f32.gmra.mrb[0].mxu0 %v465
        %v776 = vpop.f32.mrb[0].mxu0
        %v777 = vadd.f32 %v709, %v776
        %v778 = vpop.f32.mrb[0].mxu0
        %779 = vdwg.mxu0
        %v780 = vmax.f32 %v777, 0.0
        %781 = vst [vmem:[%s347] sm:$0xff] %v780
        %s782 = sand.u32 %s212, 1
        %s783 = scalar_lea.sflag [#allocation4], %s782
        %s784 = sand.u32 %s212, 1
        %s785 = smul.addr %s784, 8
        %s786 = scalar_lea.vmem [#allocation7], %s785
        // Predicated region
        $region61: #{tpu_custom_call.1} parent=51 // pred_check
          %p787 = pneg %p222
        $region62: #{tpu_custom_call.1} parent=51 // pred_check_branch
          %789 = sbr.rel (%p787) target = $region64
        $region63: #{tpu_custom_call.1} parent=51 // pred_region
          %s791 = ssub.s32 128, 128
          %792 = vsyncadd %s783, %s791
          %s793 = smul.addr %s26, 128
          %s794 = scalar_lea.hbm %s8, %s793
          %s796 = sshll.u32 %s786, 4
          %s797 = int_to_ptr.vmem [resolvable:$true] %s796
          %799 = dma.vmem_to_hbm [thread:$0]  %s797, 128, %s794, %s783
        $region64: #{tpu_custom_call.1} parent=51 // pred_fallthru
          _
      $region52: #{tpu_custom_call.1} parent=5 // pred_fallthru
        _
      %p800 = scmp.le.s32.totalorder 2, %s21
      // Predicated region
      $region65: #{tpu_custom_call.1} parent=5 // pred_check
        %p801 = pneg %p800
      $region66: #{tpu_custom_call.1} parent=5 // pred_check_branch
        %803 = sbr.rel (%p801) target = $region68
      $region67: #{tpu_custom_call.1} parent=5 // pred_region
        %s804 = ssub.s32 %s21, 2
        // Predicated region
        $region69: #{tpu_custom_call.1} parent=67 // pred_check
          %p805 = pneg %p228
        $region70: #{tpu_custom_call.1} parent=67 // pred_check_branch
          %807 = sbr.rel (%p805) target = $region72
        $region71: #{tpu_custom_call.1} parent=67 // pred_region
          %s808 = sand.u32 %s213, 1
          %s809 = scalar_lea.sflag [#allocation4], %s808
          %s810 = sand.u32 %s213, 1
          %s811 = smul.addr %s810, 8
          %s812 = scalar_lea.vmem [#allocation7], %s811
          %813 = dma.done %s809, 128
        $region72: #{tpu_custom_call.1} parent=67 // pred_fallthru
          _
      $region68: #{tpu_custom_call.1} parent=5 // pred_fallthru
        _
    $region6: #{tpu_custom_call.1} parent=1 // loop_footer
      %s25 = sadd.s32 1, %s21
    $region7: #{tpu_custom_call.1} parent=1 // loop_footer_branch
      %20 = sbr.rel target = $region3
    $region8: #{tpu_custom_call.1} parent=1 // loop_exit
      _
    %814 = vsyncpa [#allocation3], 1
    %s815 = scalar_lea.sflag [#allocation3], 1
    %816 = vsyncpa %s815, 1
    %817 = vsyncpa [#allocation4], 1
    %s818 = scalar_lea.sflag [#allocation4], 1
    %819 = vsyncpa %s818, 1
    %820 = vsyncpa [#allocation5], 1
    %s821 = scalar_lea.sflag [#allocation5], 1
    %822 = vsyncpa %s821, 1

</llo_original>
